<compile_context>
chip_gen: v6e
topology: v6e:2x2x1
jax: 0.10.0
libtpu: 0.0.40
codegen_flags: <defaults>
</compile_context>

<pallas_src>
import jax
import jax.numpy as jnp
from jax.experimental import pallas as pl
from jax.experimental.pallas import tpu as pltpu


def rcab_kernel(scal_ref, w_ref, b_ref, x_ref, o_ref):
    # scal_ref: SMEM f32[2]    = [a, c]  (folded Scale/Balance scalars)
    # w_ref:    SMEM f32[C, C]   1x1-conv weight, [c_out, c_in]
    # b_ref:    SMEM f32[C]      1x1-conv bias
    # x_ref:    VMEM (1, C, T)   input tile  (channels on sublanes, pixels on lanes)
    # o_ref:    VMEM (1, C, T)   output tile
    a = scal_ref[0]
    c = scal_ref[1]

    x = x_ref[0]                                        # (C, T)
    C = x.shape[0]
    rows = [x[ci:ci + 1, :] for ci in range(C)]         # C x (1, T)

    out_rows = []
    for co in range(C):
        # Unrolled VPU channel mix: y = sum_ci w[co, ci] * x[ci] + b[co]
        y = w_ref[co, 0] * rows[0] + b_ref[co]
        for ci in range(1, C):
            y = y + w_ref[co, ci] * rows[ci]
        # sigmoid via EUP exp + reciprocal.  (approx=True is a valid v7x
        # micro-opt; exact kept here so the numerical check stays tight.)
        sig = pl.reciprocal(1.0 + jnp.exp(-y))
        # out = a*x - c*sig*x == (a - c*sig) * x   -> 3 VPU ops per element
        out_rows.append((a - c * sig) * rows[co])

    # Single lane-dense store of the whole (C, T) block.
    o_ref[0] = jnp.concatenate(out_rows, axis=0)


def rcab_forward(x_nchw, pa_weight, pa_bias, scalars, *, max_tile=65536):
    """x_nchw: (N, C, H, W) f32; pa_weight: (C, C, 1, 1); pa_bias: (C,);
    scalars: f32[3] = [body_scale, attn_scale, balance_beta]."""
    N, C, H, W = x_nchw.shape
    HW = H * W
    x3 = x_nchw.reshape(N, C, HW).astype(jnp.float32)   # free: no data movement

    # Fold Scale()/Balance() scalars:  out = a*x - c*pa.
    body_scale, attn_scale, beta = scalars[0], scalars[1], scalars[2]
    ac = jnp.stack([beta * body_scale + (1.0 - beta),
                    beta * attn_scale]).astype(jnp.float32)

    w = pa_weight.reshape(C, C).astype(jnp.float32)      # [c_out, c_in]
    b = pa_bias.astype(jnp.float32)

    # Lane tile: as big as sensible, 128-aligned (ragged last block is masked
    # by Pallas); fall back to the full H*W extent when not 128-divisible
    # (a full-extent last dim is always a legal block shape).
    if HW % 128 == 0:
        t_hw = min(HW, max_tile)
    else:
        t_hw = HW
    grid = (N, pl.cdiv(HW, t_hw))

    out = pl.pallas_call(
        rcab_kernel,
        out_shape=jax.ShapeDtypeStruct((N, C, HW), jnp.float32),
        grid=grid,
        in_specs=[
            pl.BlockSpec(memory_space=pltpu.MemorySpace.SMEM),    # [a, c]
            pl.BlockSpec(memory_space=pltpu.MemorySpace.SMEM),    # weight
            pl.BlockSpec(memory_space=pltpu.MemorySpace.SMEM),    # bias
            pl.BlockSpec((1, C, t_hw), lambda n, s: (n, 0, s)),   # x tile
        ],
        out_specs=pl.BlockSpec((1, C, t_hw), lambda n, s: (n, 0, s)),
        compiler_params=pltpu.CompilerParams(
            dimension_semantics=("parallel", "parallel")),
    )(ac, w, b, x3)

    return out.reshape(N, C, H, W)                       # free: no data movement


def rcab_reference(x_nchw, pa_weight, pa_bias, scalars):
    """Pure-JAX reference of the same forward pass (for correctness check)."""
    N, C, H, W = x_nchw.shape
    x = x_nchw.reshape(N, C, H * W)
    w = pa_weight.reshape(C, C)
    y = jnp.einsum("oc,ncs->nos", w, x) + pa_bias[None, :, None]
    pa = jax.nn.sigmoid(y) * x
    res = scalars[0] * x - scalars[1] * pa
    out = scalars[2] * res + (1.0 - scalars[2]) * x
    return out.reshape(N, C, H, W)


if __name__ == "__main__":
    key = jax.random.PRNGKey(0)
    k_x, k_w, k_b, k_s = jax.random.split(key, 4)

    # Small shapes consistent with the module: n_feat = 4 channels.
    N, C, H, W = 2, 4, 16, 16
    x = jax.random.normal(k_x, (N, C, H, W), dtype=jnp.float32)

    # PixelAttention 1x1 conv parameters (deterministic synthetic init).
    pa_weight = (jax.random.normal(k_w, (C, C, 1, 1), dtype=jnp.float32)
                 * (1.0 / jnp.sqrt(C)))
    pa_bias = jax.random.normal(k_b, (C,), dtype=jnp.float32) * 0.1

    # Scale()/Balance() learnable scalars: [body_scale, attn_scale, beta].
    scalars = jnp.array([1.0, 1.0, 0.5], dtype=jnp.float32)

    out = rcab_forward(x, pa_weight, pa_bias, scalars)
    out = jax.block_until_ready(out)

    ref = rcab_reference(x, pa_weight, pa_bias, scalars)
    assert out.shape == (N, C, H, W)
    assert jnp.allclose(out, ref, atol=1e-5, rtol=1e-5)

    # TODO(synk): the conv3x3->ReLU->conv3x3->ChannelAttention "body" branch is
    # dead code in the PyTorch forward (its result is overwritten), so it is
    # intentionally not computed here.
    print("KERNEL_OK")
</pallas_src>

<mosaic_0001>
module attributes {stable_mosaic.version = 11 : i64} {
  func.func @rcab_kernel(%arg0: i32, %arg1: i32, %arg2: memref<2xf32, #tpu.memory_space<smem>>, %arg3: memref<4x4xf32, #tpu.memory_space<smem>>, %arg4: memref<4xf32, #tpu.memory_space<smem>>, %arg5: memref<1x4x256xf32, #tpu.memory_space<vmem>>, %arg6: memref<1x4x256xf32, #tpu.memory_space<vmem>>) attributes {dimension_semantics = [#tpu.dimension_semantics<parallel>, #tpu.dimension_semantics<parallel>], iteration_bounds = array<i64: 2, 1>, scalar_prefetch = 0 : i64, scratch_operands = 0 : i64, tpu.core_type = #tpu.core_type<tc>, window_params = [{transform_indices = @transform_0, window_bounds = array<i64: 2>}, {transform_indices = @transform_1, window_bounds = array<i64: 4, 4>}, {transform_indices = @transform_2, window_bounds = array<i64: 4>}, {transform_indices = @transform_3, window_bounds = array<i64: 1, 4, 256>}, {transform_indices = @transform_4, window_bounds = array<i64: 1, 4, 256>}]} {
    %c0 = arith.constant 0 : index
    %0 = memref.load %arg2[%c0] : memref<2xf32, #tpu.memory_space<smem>>
    %c1 = arith.constant 1 : index
    %1 = memref.load %arg2[%c1] : memref<2xf32, #tpu.memory_space<smem>>
    %c0_0 = arith.constant 0 : index
    %c0_1 = arith.constant 0 : index
    %c0_2 = arith.constant 0 : index
    %2 = vector.load %arg5[%c0_0, %c0_1, %c0_2] : memref<1x4x256xf32, #tpu.memory_space<vmem>>, vector<1x4x256xf32>
    %3 = vector.shape_cast %2 : vector<1x4x256xf32> to vector<4x256xf32>
    %4 = vector.extract_strided_slice %3 {offsets = [0, 0], sizes = [1, 256], strides = [1, 1]} : vector<4x256xf32> to vector<1x256xf32>
    %5 = vector.extract_strided_slice %3 {offsets = [1, 0], sizes = [1, 256], strides = [1, 1]} : vector<4x256xf32> to vector<1x256xf32>
    %6 = vector.extract_strided_slice %3 {offsets = [2, 0], sizes = [1, 256], strides = [1, 1]} : vector<4x256xf32> to vector<1x256xf32>
    %7 = vector.extract_strided_slice %3 {offsets = [3, 0], sizes = [1, 256], strides = [1, 1]} : vector<4x256xf32> to vector<1x256xf32>
    %c0_3 = arith.constant 0 : index
    %c0_4 = arith.constant 0 : index
    %8 = memref.load %arg3[%c0_3, %c0_4] : memref<4x4xf32, #tpu.memory_space<smem>>
    %9 = vector.broadcast %8 : f32 to vector<1x256xf32>
    %10 = arith.mulf %9, %4 : vector<1x256xf32>
    %c0_5 = arith.constant 0 : index
    %11 = memref.load %arg4[%c0_5] : memref<4xf32, #tpu.memory_space<smem>>
    %12 = vector.broadcast %11 : f32 to vector<1x256xf32>
    %13 = arith.addf %10, %12 : vector<1x256xf32>
    %c0_6 = arith.constant 0 : index
    %c1_7 = arith.constant 1 : index
    %14 = memref.load %arg3[%c0_6, %c1_7] : memref<4x4xf32, #tpu.memory_space<smem>>
    %15 = vector.broadcast %14 : f32 to vector<1x256xf32>
    %16 = arith.mulf %15, %5 : vector<1x256xf32>
    %17 = arith.addf %13, %16 : vector<1x256xf32>
    %c0_8 = arith.constant 0 : index
    %c2 = arith.constant 2 : index
    %18 = memref.load %arg3[%c0_8, %c2] : memref<4x4xf32, #tpu.memory_space<smem>>
    %19 = vector.broadcast %18 : f32 to vector<1x256xf32>
    %20 = arith.mulf %19, %6 : vector<1x256xf32>
    %21 = arith.addf %17, %20 : vector<1x256xf32>
    %c0_9 = arith.constant 0 : index
    %c3 = arith.constant 3 : index
    %22 = memref.load %arg3[%c0_9, %c3] : memref<4x4xf32, #tpu.memory_space<smem>>
    %23 = vector.broadcast %22 : f32 to vector<1x256xf32>
    %24 = arith.mulf %23, %7 : vector<1x256xf32>
    %25 = arith.addf %21, %24 : vector<1x256xf32>
    %cst = arith.constant 0.000000e+00 : f32
    %26 = vector.broadcast %cst : f32 to vector<1x256xf32>
    %27 = arith.subf %26, %25 : vector<1x256xf32>
    %28 = math.exp %27 : vector<1x256xf32>
    %cst_10 = arith.constant 1.000000e+00 : f32
    %29 = vector.broadcast %cst_10 : f32 to vector<1x256xf32>
    %30 = arith.addf %29, %28 : vector<1x256xf32>
    %31 = tpu.reciprocal %30 : vector<1x256xf32> -> vector<1x256xf32>
    %32 = vector.broadcast %1 : f32 to vector<1x256xf32>
    %33 = arith.mulf %32, %31 : vector<1x256xf32>
    %34 = vector.broadcast %0 : f32 to vector<1x256xf32>
    %35 = arith.subf %34, %33 : vector<1x256xf32>
    %36 = arith.mulf %35, %4 : vector<1x256xf32>
    %c1_11 = arith.constant 1 : index
    %c0_12 = arith.constant 0 : index
    %37 = memref.load %arg3[%c1_11, %c0_12] : memref<4x4xf32, #tpu.memory_space<smem>>
    %38 = vector.broadcast %37 : f32 to vector<1x256xf32>
    %39 = arith.mulf %38, %4 : vector<1x256xf32>
    %c1_13 = arith.constant 1 : index
    %40 = memref.load %arg4[%c1_13] : memref<4xf32, #tpu.memory_space<smem>>
    %41 = vector.broadcast %40 : f32 to vector<1x256xf32>
    %42 = arith.addf %39, %41 : vector<1x256xf32>
    %c1_14 = arith.constant 1 : index
    %c1_15 = arith.constant 1 : index
    %43 = memref.load %arg3[%c1_14, %c1_15] : memref<4x4xf32, #tpu.memory_space<smem>>
    %44 = vector.broadcast %43 : f32 to vector<1x256xf32>
    %45 = arith.mulf %44, %5 : vector<1x256xf32>
    %46 = arith.addf %42, %45 : vector<1x256xf32>
    %c1_16 = arith.constant 1 : index
    %c2_17 = arith.constant 2 : index
    %47 = memref.load %arg3[%c1_16, %c2_17] : memref<4x4xf32, #tpu.memory_space<smem>>
    %48 = vector.broadcast %47 : f32 to vector<1x256xf32>
    %49 = arith.mulf %48, %6 : vector<1x256xf32>
    %50 = arith.addf %46, %49 : vector<1x256xf32>
    %c1_18 = arith.constant 1 : index
    %c3_19 = arith.constant 3 : index
    %51 = memref.load %arg3[%c1_18, %c3_19] : memref<4x4xf32, #tpu.memory_space<smem>>
    %52 = vector.broadcast %51 : f32 to vector<1x256xf32>
    %53 = arith.mulf %52, %7 : vector<1x256xf32>
    %54 = arith.addf %50, %53 : vector<1x256xf32>
    %cst_20 = arith.constant 0.000000e+00 : f32
    %55 = vector.broadcast %cst_20 : f32 to vector<1x256xf32>
    %56 = arith.subf %55, %54 : vector<1x256xf32>
    %57 = math.exp %56 : vector<1x256xf32>
    %cst_21 = arith.constant 1.000000e+00 : f32
    %58 = vector.broadcast %cst_21 : f32 to vector<1x256xf32>
    %59 = arith.addf %58, %57 : vector<1x256xf32>
    %60 = tpu.reciprocal %59 : vector<1x256xf32> -> vector<1x256xf32>
    %61 = vector.broadcast %1 : f32 to vector<1x256xf32>
    %62 = arith.mulf %61, %60 : vector<1x256xf32>
    %63 = vector.broadcast %0 : f32 to vector<1x256xf32>
    %64 = arith.subf %63, %62 : vector<1x256xf32>
    %65 = arith.mulf %64, %5 : vector<1x256xf32>
    %c2_22 = arith.constant 2 : index
    %c0_23 = arith.constant 0 : index
    %66 = memref.load %arg3[%c2_22, %c0_23] : memref<4x4xf32, #tpu.memory_space<smem>>
    %67 = vector.broadcast %66 : f32 to vector<1x256xf32>
    %68 = arith.mulf %67, %4 : vector<1x256xf32>
    %c2_24 = arith.constant 2 : index
    %69 = memref.load %arg4[%c2_24] : memref<4xf32, #tpu.memory_space<smem>>
    %70 = vector.broadcast %69 : f32 to vector<1x256xf32>
    %71 = arith.addf %68, %70 : vector<1x256xf32>
    %c2_25 = arith.constant 2 : index
    %c1_26 = arith.constant 1 : index
    %72 = memref.load %arg3[%c2_25, %c1_26] : memref<4x4xf32, #tpu.memory_space<smem>>
    %73 = vector.broadcast %72 : f32 to vector<1x256xf32>
    %74 = arith.mulf %73, %5 : vector<1x256xf32>
    %75 = arith.addf %71, %74 : vector<1x256xf32>
    %c2_27 = arith.constant 2 : index
    %c2_28 = arith.constant 2 : index
    %76 = memref.load %arg3[%c2_27, %c2_28] : memref<4x4xf32, #tpu.memory_space<smem>>
    %77 = vector.broadcast %76 : f32 to vector<1x256xf32>
    %78 = arith.mulf %77, %6 : vector<1x256xf32>
    %79 = arith.addf %75, %78 : vector<1x256xf32>
    %c2_29 = arith.constant 2 : index
    %c3_30 = arith.constant 3 : index
    %80 = memref.load %arg3[%c2_29, %c3_30] : memref<4x4xf32, #tpu.memory_space<smem>>
    %81 = vector.broadcast %80 : f32 to vector<1x256xf32>
    %82 = arith.mulf %81, %7 : vector<1x256xf32>
    %83 = arith.addf %79, %82 : vector<1x256xf32>
    %cst_31 = arith.constant 0.000000e+00 : f32
    %84 = vector.broadcast %cst_31 : f32 to vector<1x256xf32>
    %85 = arith.subf %84, %83 : vector<1x256xf32>
    %86 = math.exp %85 : vector<1x256xf32>
    %cst_32 = arith.constant 1.000000e+00 : f32
    %87 = vector.broadcast %cst_32 : f32 to vector<1x256xf32>
    %88 = arith.addf %87, %86 : vector<1x256xf32>
    %89 = tpu.reciprocal %88 : vector<1x256xf32> -> vector<1x256xf32>
    %90 = vector.broadcast %1 : f32 to vector<1x256xf32>
    %91 = arith.mulf %90, %89 : vector<1x256xf32>
    %92 = vector.broadcast %0 : f32 to vector<1x256xf32>
    %93 = arith.subf %92, %91 : vector<1x256xf32>
    %94 = arith.mulf %93, %6 : vector<1x256xf32>
    %c3_33 = arith.constant 3 : index
    %c0_34 = arith.constant 0 : index
    %95 = memref.load %arg3[%c3_33, %c0_34] : memref<4x4xf32, #tpu.memory_space<smem>>
    %96 = vector.broadcast %95 : f32 to vector<1x256xf32>
    %97 = arith.mulf %96, %4 : vector<1x256xf32>
    %c3_35 = arith.constant 3 : index
    %98 = memref.load %arg4[%c3_35] : memref<4xf32, #tpu.memory_space<smem>>
    %99 = vector.broadcast %98 : f32 to vector<1x256xf32>
    %100 = arith.addf %97, %99 : vector<1x256xf32>
    %c3_36 = arith.constant 3 : index
    %c1_37 = arith.constant 1 : index
    %101 = memref.load %arg3[%c3_36, %c1_37] : memref<4x4xf32, #tpu.memory_space<smem>>
    %102 = vector.broadcast %101 : f32 to vector<1x256xf32>
    %103 = arith.mulf %102, %5 : vector<1x256xf32>
    %104 = arith.addf %100, %103 : vector<1x256xf32>
    %c3_38 = arith.constant 3 : index
    %c2_39 = arith.constant 2 : index
    %105 = memref.load %arg3[%c3_38, %c2_39] : memref<4x4xf32, #tpu.memory_space<smem>>
    %106 = vector.broadcast %105 : f32 to vector<1x256xf32>
    %107 = arith.mulf %106, %6 : vector<1x256xf32>
    %108 = arith.addf %104, %107 : vector<1x256xf32>
    %c3_40 = arith.constant 3 : index
    %c3_41 = arith.constant 3 : index
    %109 = memref.load %arg3[%c3_40, %c3_41] : memref<4x4xf32, #tpu.memory_space<smem>>
    %110 = vector.broadcast %109 : f32 to vector<1x256xf32>
    %111 = arith.mulf %110, %7 : vector<1x256xf32>
    %112 = arith.addf %108, %111 : vector<1x256xf32>
    %cst_42 = arith.constant 0.000000e+00 : f32
    %113 = vector.broadcast %cst_42 : f32 to vector<1x256xf32>
    %114 = arith.subf %113, %112 : vector<1x256xf32>
    %115 = math.exp %114 : vector<1x256xf32>
    %cst_43 = arith.constant 1.000000e+00 : f32
    %116 = vector.broadcast %cst_43 : f32 to vector<1x256xf32>
    %117 = arith.addf %116, %115 : vector<1x256xf32>
    %118 = tpu.reciprocal %117 : vector<1x256xf32> -> vector<1x256xf32>
    %119 = vector.broadcast %1 : f32 to vector<1x256xf32>
    %120 = arith.mulf %119, %118 : vector<1x256xf32>
    %121 = vector.broadcast %0 : f32 to vector<1x256xf32>
    %122 = arith.subf %121, %120 : vector<1x256xf32>
    %123 = arith.mulf %122, %7 : vector<1x256xf32>
    %124 = tpu.concatenate %36, %65, %94, %123 in 0 : vector<1x256xf32>, vector<1x256xf32>, vector<1x256xf32>, vector<1x256xf32> -> vector<4x256xf32>
    %c0_44 = arith.constant 0 : index
    %c0_45 = arith.constant 0 : index
    %c0_46 = arith.constant 0 : index
    %125 = vector.load %arg6[%c0_44, %c0_45, %c0_46] : memref<1x4x256xf32, #tpu.memory_space<vmem>>, vector<1x4x256xf32>
    %126 = vector.shape_cast %125 : vector<1x4x256xf32> to vector<4x256xf32>
    %127 = vector.shape_cast %124 : vector<4x256xf32> to vector<1x4x256xf32>
    tpu.vector_store %arg6[%c0_44, %c0_45, %c0_46], %127 {strides = array<i32>} : memref<1x4x256xf32, #tpu.memory_space<vmem>>, vector<1x4x256xf32>,
    return
  }
  func.func @transform_0(%arg0: i32, %arg1: i32) -> i32 {
    %c0_i32 = arith.constant 0 : i32
    %c0_i32_0 = arith.constant 0 : i32
    return %c0_i32 : i32
  }
  func.func @transform_1(%arg0: i32, %arg1: i32) -> (i32, i32) {
    %c0_i32 = arith.constant 0 : i32
    %c0_i32_0 = arith.constant 0 : i32
    %c0_i32_1 = arith.constant 0 : i32
    return %c0_i32, %c0_i32_0 : i32, i32
  }
  func.func @transform_2(%arg0: i32, %arg1: i32) -> i32 {
    %c0_i32 = arith.constant 0 : i32
    %c0_i32_0 = arith.constant 0 : i32
    return %c0_i32 : i32
  }
  func.func @transform_3(%arg0: i32, %arg1: i32) -> (i32, i32, i32) {
    %c0_i32 = arith.constant 0 : i32
    %c0_i32_0 = arith.constant 0 : i32
    return %arg0, %c0_i32, %arg1 : i32, i32, i32
  }
  func.func @transform_4(%arg0: i32, %arg1: i32) -> (i32, i32, i32) {
    %c0_i32 = arith.constant 0 : i32
    %c0_i32_0 = arith.constant 0 : i32
    return %arg0, %c0_i32, %arg1 : i32, i32, i32
  }
}

</mosaic_0001>

<llo_original>
// kernel: tpu_custom_call.1
$region0: #{tpu_custom_call.1}
  #allocation0 [shape = 'u32[]', space=smem, size = 0x4, offset = 0x4, fixed_abs, tag = 'smem constant byte address 0x4 - core index']
  #allocation1 [shape = 'u32[144,128]{1,0:T(1,128)}', space=vmem, size = 0x12000, scoped, tag = 'internal scratch']
  %s0 = inlined_call_operand.hbm [shape: f32[2], index: 0, kind: input, shape index: {}]
  %s1 = inlined_call_operand.hbm [shape: f32[4,4], index: 1, kind: input, shape index: {}]
  %s2 = inlined_call_operand.vmem [shape: f32[4], index: 2, kind: input, shape index: {}]
  %s3 = inlined_call_operand.hbm [shape: f32[2,4,256], index: 3, kind: input, shape index: {}]
  %s4 = inlined_call_operand.hbm [shape: f32[2,4,256], index: 4, kind: output, shape index: {}]
  %s5 = sld [smem:[#allocation0]]
  $region65: #{tpu_custom_call.1} parent=0
    _
  %s7 = ssub.s32 1, %s5
  %s8 = scalar_select 0, %s7, %s5
  $region1: #{tpu_custom_call.1} parent=0
    #allocation2 [shape = 'u8[512]{0}', space=smem, size = 0x200, scoped, tag = 'input window, operand 0, single buffered']
    #allocation3 [shape = 's32[2]{0}', space=sflag, size = 0x8, scoped, tag = 'scoped memory for tpu_custom_call.1']
    #allocation4 [shape = 's32[2]{0}', space=sflag, size = 0x8, scoped, tag = 'scoped memory for tpu_custom_call.1']
    #allocation5 [shape = 's32[2]{0}', space=sflag, size = 0x8, scoped, tag = 'scoped memory for tpu_custom_call.1']
    #allocation6 [shape = 's32[2]{0}', space=sflag, size = 0x8, scoped, tag = 'scoped memory for tpu_custom_call.1']
    #allocation7 [shape = 'u8[2048]{0}', space=smem, size = 0x800, scoped, tag = 'input window, operand 1, single buffered']
    #allocation8 [shape = 's32[1]{0}', space=sflag, size = 0x4, scoped, tag = 'scoped memory for tpu_custom_call.1']
    #allocation9 [shape = 'u8[512]{0}', space=smem, size = 0x200, scoped, tag = 'input window, operand 2, single buffered']
    #allocation10 [shape = 'u8[8192]{0}', space=vmem, size = 0x2000, scoped, tag = 'input window, operand 3']
    #allocation11 [shape = 'u8[8192]{0}', space=vmem, size = 0x2000, scoped, tag = 'output window, operand 0']
    %9 = vsyncpa [#allocation5], 0
    %10 = vsyncpa [#allocation8], 0
    %11 = vsyncpa [#allocation6], 0
    %12 = vsyncpa [#allocation3], 0
    %s13 = scalar_lea.sflag [#allocation3], 1
    %14 = vsyncpa %s13, 0
    %15 = vsyncpa [#allocation4], 0
    %s16 = scalar_lea.sflag [#allocation4], 1
    %17 = vsyncpa %s16, 0
    loop: start=0, step=1, limit=4
    $region2: #{tpu_custom_call.1} parent=1 // loop_pre_header
      _
    $region3: #{tpu_custom_call.1} parent=1 // loop_header
      %s19 = sphi 0, %s23
      %p20 = scmp.ge.s32.totalorder %s19, 4
      %s26 = sphi 0, %s38
      %s27 = sphi 0, %s34
      %s28 = sphi 0, %s26
      %s29 = sphi 0, %s27
      %s30 = sphi 0, %s28
      %s31 = sphi 0, %s29
      %s39 = sphi 0, %s39
      %s41 = sphi 0, %s39
      %s42 = sphi 0, %s41
      %s56 = sphi 0, %s42
      %s60 = sphi 0, %s60
      %s62 = sphi 0, %s60
      %s63 = sphi 0, %s62
      %s77 = sphi 0, %s63
      %s81 = sphi 0, %s81
      %s83 = sphi 0, %s81
      %s84 = sphi 0, %s83
      %s98 = sphi 0, %s84
      %s106 = sphi 0, %s108
      %s109 = sphi 0, %s106
      %s110 = sphi 0, %s109
      %s126 = sphi 0, %s110
      %s134 = sphi 0, %s136
      %s137 = sphi 0, %s134
      %s138 = sphi 0, %s137
      %s154 = sphi 0, %s138
    $region4: #{tpu_custom_call.1} parent=1 // loop_header_branch
      %22 = sbr.rel (%p20) target = $region8
    $region5: #{tpu_custom_call.1} parent=1 // loop_body
      %s24 = ssub.s32 %s19, 1
      %s25 = ssub.s32 %s19, 2
      %s32 = sadd.s32 1, %s27
      %p33 = scmp.ge.s32.totalorder %s32, 1
      %s34 = scalar_select %p33, 0, %s32
      %s35 = sadd.s32 1, %s26
      %s36 = scalar_select %p33, %s35, %s26
      %p37 = scmp.ge.s32.totalorder %s36, 2
      %s38 = scalar_select %p37, 0, %s36
      %s40 = sadd.s32 %s39, 1
      %p43 = scmp.eq.s32.totalorder %s19, 1
      %p44 = scmp.ne.s32.totalorder %s39, %s41
      %p45 = scmp.eq.s32.totalorder %s19, 0
      %p46 = por %p44, %p45
      %p47 = scmp.ne.s32.totalorder %s39, %s41
      %p48 = scmp.eq.s32.totalorder %s24, 1
      %p49 = por %p47, %p48
      %p50 = scmp.ne.s32.totalorder %s41, %s42
      %p51 = scmp.eq.s32.totalorder %s24, 0
      %p52 = por %p50, %p51
      %p53 = scmp.ne.s32.totalorder %s41, %s42
      %p54 = scmp.eq.s32.totalorder %s25, 1
      %p55 = por %p53, %p54
      %p57 = scmp.ne.s32.totalorder %s42, %s56
      %p58 = scmp.eq.s32.totalorder %s25, 0
      %p59 = por %p57, %p58
      %s61 = sadd.s32 %s60, 1
      %p64 = scmp.eq.s32.totalorder %s19, 1
      %p65 = scmp.ne.s32.totalorder %s60, %s62
      %p66 = scmp.eq.s32.totalorder %s19, 0
      %p67 = por %p65, %p66
      %p68 = scmp.ne.s32.totalorder %s60, %s62
      %p69 = scmp.eq.s32.totalorder %s24, 1
      %p70 = por %p68, %p69
      %p71 = scmp.ne.s32.totalorder %s62, %s63
      %p72 = scmp.eq.s32.totalorder %s24, 0
      %p73 = por %p71, %p72
      %p74 = scmp.ne.s32.totalorder %s62, %s63
      %p75 = scmp.eq.s32.totalorder %s25, 1
      %p76 = por %p74, %p75
      %p78 = scmp.ne.s32.totalorder %s63, %s77
      %p79 = scmp.eq.s32.totalorder %s25, 0
      %p80 = por %p78, %p79
      %s82 = sadd.s32 %s81, 1
      %p85 = scmp.eq.s32.totalorder %s19, 1
      %p86 = scmp.ne.s32.totalorder %s81, %s83
      %p87 = scmp.eq.s32.totalorder %s19, 0
      %p88 = por %p86, %p87
      %p89 = scmp.ne.s32.totalorder %s81, %s83
      %p90 = scmp.eq.s32.totalorder %s24, 1
      %p91 = por %p89, %p90
      %p92 = scmp.ne.s32.totalorder %s83, %s84
      %p93 = scmp.eq.s32.totalorder %s24, 0
      %p94 = por %p92, %p93
      %p95 = scmp.ne.s32.totalorder %s83, %s84
      %p96 = scmp.eq.s32.totalorder %s25, 1
      %p97 = por %p95, %p96
      %p99 = scmp.ne.s32.totalorder %s84, %s98
      %p100 = scmp.eq.s32.totalorder %s25, 0
      %p101 = por %p99, %p100
      %s102 = ssub.s32 %s26, %s38
      %s103 = ssub.s32 %s27, %s34
      %s104 = sor.u32 %s102, %s103
      %p105 = scmp.eq.s32.totalorder %s104, 0
      %s107 = sadd.s32 %s106, 1
      %s108 = scalar_select %p105, %s106, %s107
      %p111 = pneg %p105
      %p112 = scmp.eq.s32.totalorder %s19, 1
      %p113 = por %p111, %p112
      %p114 = scmp.ne.s32.totalorder %s106, %s109
      %p115 = scmp.eq.s32.totalorder %s19, 0
      %p116 = por %p114, %p115
      %p117 = scmp.ne.s32.totalorder %s106, %s109
      %p118 = scmp.eq.s32.totalorder %s24, 1
      %p119 = por %p117, %p118
      %p120 = scmp.ne.s32.totalorder %s109, %s110
      %p121 = scmp.eq.s32.totalorder %s24, 0
      %p122 = por %p120, %p121
      %p123 = scmp.ne.s32.totalorder %s109, %s110
      %p124 = scmp.eq.s32.totalorder %s25, 1
      %p125 = por %p123, %p124
      %p127 = scmp.ne.s32.totalorder %s110, %s126
      %p128 = scmp.eq.s32.totalorder %s25, 0
      %p129 = por %p127, %p128
      %s130 = ssub.s32 %s26, %s38
      %s131 = ssub.s32 %s27, %s34
      %s132 = sor.u32 %s130, %s131
      %p133 = scmp.eq.s32.totalorder %s132, 0
      %s135 = sadd.s32 %s134, 1
      %s136 = scalar_select %p133, %s134, %s135
      %p139 = pneg %p133
      %p140 = scmp.eq.s32.totalorder %s19, 1
      %p141 = por %p139, %p140
      %p142 = scmp.ne.s32.totalorder %s134, %s137
      %p143 = scmp.eq.s32.totalorder %s19, 0
      %p144 = por %p142, %p143
      %p145 = scmp.ne.s32.totalorder %s134, %s137
      %p146 = scmp.eq.s32.totalorder %s24, 1
      %p147 = por %p145, %p146
      %p148 = scmp.ne.s32.totalorder %s137, %s138
      %p149 = scmp.eq.s32.totalorder %s24, 0
      %p150 = por %p148, %p149
      %p151 = scmp.ne.s32.totalorder %s137, %s138
      %p152 = scmp.eq.s32.totalorder %s25, 1
      %p153 = por %p151, %p152
      %p155 = scmp.ne.s32.totalorder %s138, %s154
      %p156 = scmp.eq.s32.totalorder %s25, 0
      %p157 = por %p155, %p156
      %p158 = scmp.le.s32.totalorder 1, %s19
      %p159 = scmp.lt.s32.totalorder %s19, 3
      %p160 = pnand %p158, %p159
      %p161 = pneg %p160
      // Predicated region
      $region9: #{tpu_custom_call.1} parent=5 // pred_check
        _
      $region10: #{tpu_custom_call.1} parent=5 // pred_check_branch
        %163 = sbr.rel (%p160) target = $region12
      $region11: #{tpu_custom_call.1} parent=5 // pred_region
        %s164 = ssub.s32 %s19, 1
        // Predicated region
        $region13: #{tpu_custom_call.1} parent=11 // pred_check
          %p165 = pneg %p52
        $region14: #{tpu_custom_call.1} parent=11 // pred_check_branch
          %167 = sbr.rel (%p165) target = $region16
        $region15: #{tpu_custom_call.1} parent=11 // pred_region
          %s169 = ssub.s32 16, 16
          %170 = vsyncadd [#allocation5], %s169
          %173 = dma.hbm_to_smem %s0, 16, [#allocation2], [#allocation5]
        $region16: #{tpu_custom_call.1} parent=11 // pred_fallthru
          _
        // Predicated region
        $region17: #{tpu_custom_call.1} parent=11 // pred_check
          %p174 = pneg %p73
        $region18: #{tpu_custom_call.1} parent=11 // pred_check_branch
          %176 = sbr.rel (%p174) target = $region20
        $region19: #{tpu_custom_call.1} parent=11 // pred_region
          %s178 = ssub.s32 64, 64
          %179 = vsyncadd [#allocation8], %s178
          %182 = dma.hbm_to_smem %s1, 64, [#allocation7], [#allocation8]
        $region20: #{tpu_custom_call.1} parent=11 // pred_fallthru
          _
        // Predicated region
        $region21: #{tpu_custom_call.1} parent=11 // pred_check
          %p183 = pneg %p94
        $region22: #{tpu_custom_call.1} parent=11 // pred_check_branch
          %185 = sbr.rel (%p183) target = $region24
        $region23: #{tpu_custom_call.1} parent=11 // pred_region
          %s187 = ssub.s32 16, 16
          %188 = vsyncadd [#allocation6], %s187
          %s190 = sshll.u32 %s2, 4
          %s191 = int_to_ptr.vmem [resolvable:$true] %s190
          %193 = dma.vmem_to_smem %s191, 16, [#allocation9], [#allocation6]
        $region24: #{tpu_custom_call.1} parent=11 // pred_fallthru
          _
      $region12: #{tpu_custom_call.1} parent=5 // pred_fallthru
        _
      %p194 = scmp.lt.s32.totalorder %s19, 2
      // Predicated region
      $region25: #{tpu_custom_call.1} parent=5 // pred_check
        %p195 = pneg %p194
      $region26: #{tpu_custom_call.1} parent=5 // pred_check_branch
        %197 = sbr.rel (%p195) target = $region28
      $region27: #{tpu_custom_call.1} parent=5 // pred_region
        // Predicated region
        $region29: #{tpu_custom_call.1} parent=27 // pred_check
          %p198 = pneg %p116
        $region30: #{tpu_custom_call.1} parent=27 // pred_check_branch
          %200 = sbr.rel (%p198) target = $region32
        $region31: #{tpu_custom_call.1} parent=27 // pred_region
          %s201 = sand.u32 %s106, 1
          %s202 = scalar_lea.sflag [#allocation3], %s201
          %s203 = sand.u32 %s106, 1
          %s204 = smul.addr %s203, 8
          %s205 = scalar_lea.vmem [#allocation10], %s204
          %s206 = smul.u32 2, %s27
          %s208 = ssub.s32 128, 128
          %209 = vsyncadd %s202, %s208
          %s210 = smul.addr %s26, 2
          %s211 = sadd.s32 %s206, %s210
          %s212 = smul.addr %s211, 64
          %s213 = scalar_lea.hbm %s3, %s212
          %s215 = sshll.u32 %s205, 4
          %s216 = int_to_ptr.vmem [resolvable:$true] %s215
          %218 = dma.hbm_to_vmem [thread:$0]  %s213, 128, %s216, %s202
        $region32: #{tpu_custom_call.1} parent=27 // pred_fallthru
          _
      $region28: #{tpu_custom_call.1} parent=5 // pred_fallthru
        _
      %p219 = scmp.le.s32.totalorder 1, %s19
      %p220 = scmp.lt.s32.totalorder %s19, 3
      %p221 = pnand %p219, %p220
      %p222 = pneg %p221
      // Predicated region
      $region33: #{tpu_custom_call.1} parent=5 // pred_check
        _
      $region34: #{tpu_custom_call.1} parent=5 // pred_check_branch
        %224 = sbr.rel (%p221) target = $region36
      $region35: #{tpu_custom_call.1} parent=5 // pred_region
        %s225 = ssub.s32 %s19, 1
        // Predicated region
        $region37: #{tpu_custom_call.1} parent=35 // pred_check
          %p226 = pneg %p52
        $region38: #{tpu_custom_call.1} parent=35 // pred_check_branch
          %228 = sbr.rel (%p226) target = $region40
        $region39: #{tpu_custom_call.1} parent=35 // pred_region
          %229 = dma.done [#allocation5], 16
        $region40: #{tpu_custom_call.1} parent=35 // pred_fallthru
          _
        // Predicated region
        $region41: #{tpu_custom_call.1} parent=35 // pred_check
          %p230 = pneg %p73
        $region42: #{tpu_custom_call.1} parent=35 // pred_check_branch
          %232 = sbr.rel (%p230) target = $region44
        $region43: #{tpu_custom_call.1} parent=35 // pred_region
          %233 = dma.done [#allocation8], 64
        $region44: #{tpu_custom_call.1} parent=35 // pred_fallthru
          _
        // Predicated region
        $region45: #{tpu_custom_call.1} parent=35 // pred_check
          %p234 = pneg %p94
        $region46: #{tpu_custom_call.1} parent=35 // pred_check_branch
          %236 = sbr.rel (%p234) target = $region48
        $region47: #{tpu_custom_call.1} parent=35 // pred_region
          %237 = dma.done [#allocation6], 16
        $region48: #{tpu_custom_call.1} parent=35 // pred_fallthru
          _
        %s238 = sand.u32 %s109, 1
        %s239 = scalar_lea.sflag [#allocation3], %s238
        %s240 = sand.u32 %s109, 1
        %s241 = smul.addr %s240, 8
        %s242 = scalar_lea.vmem [#allocation10], %s241
        // Predicated region
        $region49: #{tpu_custom_call.1} parent=35 // pred_check
          %p243 = pneg %p122
        $region50: #{tpu_custom_call.1} parent=35 // pred_check_branch
          %245 = sbr.rel (%p243) target = $region52
        $region51: #{tpu_custom_call.1} parent=35 // pred_region
          %246 = dma.done %s239, 128
        $region52: #{tpu_custom_call.1} parent=35 // pred_fallthru
          _
        %247 = sfence
        %p248 = pneg %p52
        %p249 = pneg %p49
        %p250 = pneg %p73
        %p251 = pneg %p70
        %p252 = pneg %p94
        %p253 = pneg %p91
        %s254 = sand.u32 %s109, 1
        %s255 = scalar_lea.sflag [#allocation3], %s254
        %s256 = sand.u32 %s109, 1
        %s257 = smul.addr %s256, 8
        %s258 = scalar_lea.vmem [#allocation10], %s257
        %p259 = pneg %p122
        %p260 = pneg %p119
        %p261 = pneg %p150
        %p262 = pneg %p147
        %s263 = sand.u32 %s137, 1
        %s264 = scalar_lea.sflag [#allocation4], %s263
        %s265 = sand.u32 %s137, 1
        %s266 = smul.addr %s265, 8
        %s267 = scalar_lea.vmem [#allocation11], %s266
        %s268 = smul.u32 2, %s29
        %s269 = smul.u32 2, %s29
        %s270 = sld [smem:[#allocation2]]
        %s271 = sld [smem:[#allocation2 + $0x1]]
        %v272 = vld [vmem:[%s242] sm:$0xff]
        %s273 = sld [smem:[#allocation7]]
        %v274 = vstv %s273
        %v275 = vmul.f32 %v274, %v272
        %s276 = sld [smem:[#allocation9]]
        %v277 = vstv %s276
        %v278 = vadd.f32 %v275, %v277
        %s279 = sld [smem:[#allocation7 + $0x1]]
        %v280 = vstv %s279
        %v281 = vmul.f32 %v280, %v272
        %v283 = vrot.slane %v281, 5
        %v284 = vrot.slane %v283, 4
        %v286 = vadd.f32 %v278, %v284
        %s287 = sld [smem:[#allocation7 + $0x2]]
        %v288 = vstv %s287
        %v289 = vmul.f32 %v288, %v272
        %v291 = vrot.slane %v289, 6
        %v292 = vrot.slane %v291, 4
        %v294 = vadd.f32 %v286, %v292
        %s295 = sld [smem:[#allocation7 + $0x3]]
        %v296 = vstv %s295
        %v297 = vmul.f32 %v296, %v272
        %v299 = vrot.slane %v297, 7
        %v300 = vrot.slane %v299, 4
        %v302 = vadd.f32 %v294, %v300
        %v303 = vsub.f32 0.0, %v302
        %v304 = vmul.f32 %v303, 1.442695
        %v305 = vpow.pop %v304
        %v306 = vadd.f32 %v305, 1.0
        %v307 = vrcp.pop %v306
        %v308 = vstv %s271
        %v309 = vmul.f32 %v308, %v307
        %v310 = vstv %s270
        %v311 = vsub.f32 %v310, %v309
        %v312 = vmul.f32 %v311, %v272
        %s313 = sld [smem:[#allocation7 + $0x80]]
        %v314 = vstv %s313
        %v315 = vmul.f32 %v314, %v272
        %s316 = sld [smem:[#allocation9 + $0x1]]
        %v317 = vstv %s316
        %v318 = vadd.f32 %v315, %v317
        %s319 = sld [smem:[#allocation7 + $0x81]]
        %v320 = vstv %s319
        %v321 = vmul.f32 %v320, %v272
        %v323 = vrot.slane %v321, 5
        %v324 = vrot.slane %v323, 4
        %v326 = vadd.f32 %v318, %v324
        %s327 = sld [smem:[#allocation7 + $0x82]]
        %v328 = vstv %s327
        %v329 = vmul.f32 %v328, %v272
        %v331 = vrot.slane %v329, 6
        %v332 = vrot.slane %v331, 4
        %v334 = vadd.f32 %v326, %v332
        %s335 = sld [smem:[#allocation7 + $0x83]]
        %v336 = vstv %s335
        %v337 = vmul.f32 %v336, %v272
        %v339 = vrot.slane %v337, 7
        %v340 = vrot.slane %v339, 4
        %v342 = vadd.f32 %v334, %v340
        %v343 = vsub.f32 0.0, %v342
        %v344 = vmul.f32 %v343, 1.442695
        %v345 = vpow.pop %v344
        %v346 = vadd.f32 %v345, 1.0
        %v347 = vrcp.pop %v346
        %v348 = vmul.f32 %v308, %v347
        %v349 = vsub.f32 %v310, %v348
        %v351 = vrot.slane %v272, 5
        %v352 = vrot.slane %v351, 4
        %v354 = vmul.f32 %v349, %v352
        %s355 = sld [smem:[#allocation7 + $0x100]]
        %v356 = vstv %s355
        %v357 = vmul.f32 %v356, %v272
        %s358 = sld [smem:[#allocation9 + $0x2]]
        %v359 = vstv %s358
        %v360 = vadd.f32 %v357, %v359
        %s361 = sld [smem:[#allocation7 + $0x101]]
        %v362 = vstv %s361
        %v363 = vmul.f32 %v362, %v272
        %v365 = vrot.slane %v363, 5
        %v366 = vrot.slane %v365, 4
        %v368 = vadd.f32 %v360, %v366
        %s369 = sld [smem:[#allocation7 + $0x102]]
        %v370 = vstv %s369
        %v371 = vmul.f32 %v370, %v272
        %v373 = vrot.slane %v371, 6
        %v374 = vrot.slane %v373, 4
        %v376 = vadd.f32 %v368, %v374
        %s377 = sld [smem:[#allocation7 + $0x103]]
        %v378 = vstv %s377
        %v379 = vmul.f32 %v378, %v272
        %v381 = vrot.slane %v379, 7
        %v382 = vrot.slane %v381, 4
        %v384 = vadd.f32 %v376, %v382
        %v385 = vsub.f32 0.0, %v384
        %v386 = vmul.f32 %v385, 1.442695
        %v387 = vpow.pop %v386
        %v388 = vadd.f32 %v387, 1.0
        %v389 = vrcp.pop %v388
        %v390 = vmul.f32 %v308, %v389
        %v391 = vsub.f32 %v310, %v390
        %v392 = vrot.slane %v272, 6
        %v393 = vrot.slane %v392, 4
        %v395 = vmul.f32 %v391, %v393
        %s396 = sld [smem:[#allocation7 + $0x180]]
        %v397 = vstv %s396
        %v398 = vmul.f32 %v397, %v272
        %s399 = sld [smem:[#allocation9 + $0x3]]
        %v400 = vstv %s399
        %v401 = vadd.f32 %v398, %v400
        %s402 = sld [smem:[#allocation7 + $0x181]]
        %v403 = vstv %s402
        %v404 = vmul.f32 %v403, %v272
        %v406 = vrot.slane %v404, 5
        %v407 = vrot.slane %v406, 4
        %v409 = vadd.f32 %v401, %v407
        %s410 = sld [smem:[#allocation7 + $0x182]]
        %v411 = vstv %s410
        %v412 = vmul.f32 %v411, %v272
        %v414 = vrot.slane %v412, 6
        %v415 = vrot.slane %v414, 4
        %v417 = vadd.f32 %v409, %v415
        %s418 = sld [smem:[#allocation7 + $0x183]]
        %v419 = vstv %s418
        %v420 = vmul.f32 %v419, %v272
        %v422 = vrot.slane %v420, 7
        %v423 = vrot.slane %v422, 4
        %v425 = vadd.f32 %v417, %v423
        %v426 = vsub.f32 0.0, %v425
        %v427 = vmul.f32 %v426, 1.442695
        %v428 = vpow.pop %v427
        %v429 = vadd.f32 %v428, 1.0
        %v430 = vrcp.pop %v429
        %v431 = vmul.f32 %v308, %v430
        %v432 = vsub.f32 %v310, %v431
        %v433 = vrot.slane %v272, 7
        %v434 = vrot.slane %v433, 4
        %v436 = vmul.f32 %v432, %v434
        %v438 = vlaneseq
        %v439 = vshrl.u32 %v438, 7
        %v440 = vsub.s32 0, %v439
        %v441 = vrot.slane %v312, %v440
        %v442 = vlaneseq
        %v443 = vshrl.u32 %v442, 7
        %v444 = vsub.s32 4, %v443
        %v445 = vrot.slane %v312, %v444
        %v449 = vlaneseq
        %v450 = vshrl.u32 %v449, 7
        %v451 = vsub.s32 0, %v450
        %v452 = vrot.slane %v354, %v451
        %v453 = vlaneseq
        %v454 = vshrl.u32 %v453, 7
        %v455 = vsub.s32 4, %v454
        %v456 = vrot.slane %v354, %v455
        %v460 = vlaneseq
        %v461 = vshrl.u32 %v460, 7
        %v462 = vsub.s32 0, %v461
        %v463 = vrot.slane %v395, %v462
        %v464 = vlaneseq
        %v465 = vshrl.u32 %v464, 7
        %v466 = vsub.s32 4, %v465
        %v467 = vrot.slane %v395, %v466
        %v471 = vlaneseq
        %v472 = vshrl.u32 %v471, 7
        %v473 = vsub.s32 0, %v472
        %v474 = vrot.slane %v436, %v473
        %v475 = vlaneseq
        %v476 = vshrl.u32 %v475, 7
        %v477 = vsub.s32 4, %v476
        %v478 = vrot.slane %v436, %v477
        %vm481 = vcmask 1040384
        %v482 = vsel %vm481, %v441, %v452
        %v483 = vsel %vm481, %v445, %v456
        %vm484 = vcmask 1041408
        %v485 = vsel %vm484, %v482, %v463
        %v486 = vsel %vm484, %v483, %v467
        %vm487 = vcmask 1042432
        %v488 = vsel %vm487, %v485, %v474
        %v489 = vsel %vm487, %v486, %v478
        %v492 = vcombine.low %v488, %v489
        %494 = vst [vmem:[%s267] sm:$0xff] %v492
        %s495 = sand.u32 %s137, 1
        %s496 = scalar_lea.sflag [#allocation4], %s495
        %s497 = sand.u32 %s137, 1
        %s498 = smul.addr %s497, 8
        %s499 = scalar_lea.vmem [#allocation11], %s498
        // Predicated region
        $region53: #{tpu_custom_call.1} parent=35 // pred_check
          %p500 = pneg %p147
        $region54: #{tpu_custom_call.1} parent=35 // pred_check_branch
          %502 = sbr.rel (%p500) target = $region56
        $region55: #{tpu_custom_call.1} parent=35 // pred_region
          %s503 = smul.u32 2, %s29
          %s505 = ssub.s32 128, 128
          %506 = vsyncadd %s496, %s505
          %s507 = smul.addr %s28, 2
          %s508 = sadd.s32 %s503, %s507
          %s509 = smul.addr %s508, 64
          %s510 = scalar_lea.hbm %s4, %s509
          %s512 = sshll.u32 %s499, 4
          %s513 = int_to_ptr.vmem [resolvable:$true] %s512
          %515 = dma.vmem_to_hbm [thread:$0]  %s513, 128, %s510, %s496
        $region56: #{tpu_custom_call.1} parent=35 // pred_fallthru
          _
      $region36: #{tpu_custom_call.1} parent=5 // pred_fallthru
        _
      %p516 = scmp.le.s32.totalorder 2, %s19
      // Predicated region
      $region57: #{tpu_custom_call.1} parent=5 // pred_check
        %p517 = pneg %p516
      $region58: #{tpu_custom_call.1} parent=5 // pred_check_branch
        %519 = sbr.rel (%p517) target = $region60
      $region59: #{tpu_custom_call.1} parent=5 // pred_region
        %s520 = ssub.s32 %s19, 2
        // Predicated region
        $region61: #{tpu_custom_call.1} parent=59 // pred_check
          %p521 = pneg %p153
        $region62: #{tpu_custom_call.1} parent=59 // pred_check_branch
          %523 = sbr.rel (%p521) target = $region64
        $region63: #{tpu_custom_call.1} parent=59 // pred_region
          %s524 = sand.u32 %s138, 1
          %s525 = scalar_lea.sflag [#allocation4], %s524
          %s526 = sand.u32 %s138, 1
          %s527 = smul.addr %s526, 8
          %s528 = scalar_lea.vmem [#allocation11], %s527
          %529 = dma.done %s525, 128
        $region64: #{tpu_custom_call.1} parent=59 // pred_fallthru
          _
      $region60: #{tpu_custom_call.1} parent=5 // pred_fallthru
        _
    $region6: #{tpu_custom_call.1} parent=1 // loop_footer
      %s23 = sadd.s32 1, %s19
    $region7: #{tpu_custom_call.1} parent=1 // loop_footer_branch
      %18 = sbr.rel target = $region3
    $region8: #{tpu_custom_call.1} parent=1 // loop_exit
      _
    %530 = vsyncpa [#allocation3], 1
    %s531 = scalar_lea.sflag [#allocation3], 1
    %532 = vsyncpa %s531, 1
    %533 = vsyncpa [#allocation4], 1
    %s534 = scalar_lea.sflag [#allocation4], 1
    %535 = vsyncpa %s534, 1
    %536 = vsyncpa [#allocation5], 1
    %s537 = scalar_lea.sflag [#allocation5], 1
    %538 = vsyncpa %s537, 1
    %539 = vsyncpa [#allocation8], 1
    %540 = vsyncpa [#allocation6], 1
    %s541 = scalar_lea.sflag [#allocation6], 1
    %542 = vsyncpa %s541, 1

</llo_original>
